<compile_context>
chip_gen: v5e
topology: v5e:2x2
jax: 0.10.0
libtpu: 0.0.40
codegen_flags: <defaults>
</compile_context>

<pallas_src>
import functools
import jax
import jax.numpy as jnp
from jax.experimental import pallas as pl
from jax.experimental.pallas import tpu as pltpu


# --------------------------- Pallas kernel body -------------------------------

def _cube_embed_kernel(p_ref, w_ref, bgb_ref, o_ref):
    # p_ref  : (tm, Kp) bf16   im2col patch rows, cols ordered (kt, kh, kw, c), K zero-padded
    # w_ref  : (Kp, D)  bf16   permuted Conv3d weight, K zero-padded
    # bgb_ref: (3, D)   f32    [bias; ln_gamma; ln_beta]
    # o_ref  : (tm, D)  bf16
    y = jnp.dot(p_ref[...], w_ref[...], preferred_element_type=jnp.float32)
    bias = bgb_ref[0:1, :]
    gamma = bgb_ref[1:2, :]
    beta = bgb_ref[2:3, :]
    y = y + bias
    # Fused LayerNorm over D (biased variance, eps=1e-5, matching torch.nn.LayerNorm):
    # one pass for both moments (independent cross-lane reductions), var = E[y^2]-mu^2,
    # rsqrt lands on EUP, final write is a single y*scale + shift pass.
    inv_d = 1.0 / y.shape[-1]
    mu = jnp.sum(y, axis=-1, keepdims=True) * inv_d
    ms = jnp.sum(y * y, axis=-1, keepdims=True) * inv_d
    var = ms - mu * mu
    scale = gamma * jax.lax.rsqrt(var + 1e-5)      # (tm, D)
    shift = beta - mu * scale                      # (tm, D)
    o_ref[...] = (y * scale + shift).astype(o_ref.dtype)


# ------------------------------ wrapper / glue ---------------------------------

def _round_up(a, b):
    return (a + b - 1) // b * b


def _pick_tile_m(M, Kp, D):
    """Largest lane/sublane-aligned M tile whose double-buffered footprint fits
    comfortably under the smallest default scoped-VMEM limit (v5e: 16 MiB)."""
    row_bytes = 2 * (Kp * 2 + D * 2)               # double-buffered bf16 in + bf16 out
    budget = 10 * 1024 * 1024
    tm_cap = max(64, min(2048, (budget // row_bytes) // 64 * 64))
    if M >= 2 * tm_cap:
        return tm_cap
    # Small problem: still take >=2 grid steps (v7x megacore) without over-padding.
    return min(tm_cap, max(8, _round_up(pl.cdiv(M, 2), 8)))


def _build_patches(x, w_torch, cfg):
    """im2col for the Conv3d 'cube' patchify + weight permutation.

    Activation is cast to bf16 FIRST so the materialized patch intermediate is
    2 B/elem.  Only strided slices/reshapes on the activation; the (kt,kh,kw,c)
    column ordering is matched by permuting the constant weight at trace time."""
    B, C, T, H, W = x.shape
    kt, ks = cfg["segment_size"], cfg["patch_size"]
    st, ss = cfg["stride_t"], cfg["stride_s"]
    pt, ps = cfg["padding_t"], cfg["padding_s"]
    D = w_torch.shape[0]

    xb = x.astype(jnp.bfloat16)
    xp = jnp.pad(xb, ((0, 0), (0, 0), (pt, pt), (ps, ps), (ps, ps)))
    Tp, Hp, Wp = T + 2 * pt, H + 2 * ps, W + 2 * ps
    To = (Tp - kt) // st + 1
    Ho = (Hp - ks) // ss + 1
    Wo = (Wp - ks) // ss + 1

    x_cl = jnp.transpose(xp, (0, 2, 3, 4, 1))          # (B, Tp, Hp, Wp, C) bf16
    slices = []
    for dt in range(kt):
        for dh in range(ks):
            for dw in range(ks):
                slices.append(
                    x_cl[:, dt:dt + st * (To - 1) + 1:st,
                            dh:dh + ss * (Ho - 1) + 1:ss,
                            dw:dw + ss * (Wo - 1) + 1:ss, :])
    patches = jnp.stack(slices, axis=4)                # (B, To, Ho, Wo, kt*ks*ks, C)

    M = B * To * Ho * Wo
    K = kt * ks * ks * C
    p = patches.reshape(M, K)                          # bf16

    # PyTorch Conv3d weight (D, C, kt, kh, kw) -> cols (kt, kh, kw, C) x D
    w = jnp.transpose(w_torch, (2, 3, 4, 1, 0)).reshape(K, D).astype(jnp.bfloat16)
    return p, w, (To, Ho, Wo)


def cube_embed_forward(x, params, cfg):
    B = x.shape[0]
    D = params["w"].shape[0]

    p, w, (To, Ho, Wo) = _build_patches(x, params["w"], cfg)
    M, K = p.shape

    # Lane-align the contraction and pad the row count to a tile multiple (zeros
    # contribute nothing to the dot; padded rows are sliced away afterwards).
    Kp = _round_up(K, 128)
    tm = _pick_tile_m(M, Kp, D)
    Mp = _round_up(M, tm)
    if Kp != K or Mp != M:
        p = jnp.pad(p, ((0, Mp - M), (0, Kp - K)))
        w = jnp.pad(w, ((0, Kp - K), (0, 0)))

    # merged broadcast vectors: one operand, one DMA descriptor
    bgb = jnp.stack([params["b"], params["g"], params["beta"]], axis=0)  # (3, D) f32

    grid_m = Mp // tm

    # VMEM footprint: double-buffered (p tile + out tile) + constant operands.
    dbl_buf = 2 * tm * (Kp * 2 + D * 2)
    const_buf = 2 * (Kp * D * 2 + 8 * max(D, 128) * 4)
    vmem_limit = int(min(40 * 1024 * 1024, max(16 * 1024 * 1024, 2 * (dbl_buf + const_buf))))

    cost = pl.CostEstimate(
        flops=2 * Mp * Kp * D,
        transcendentals=Mp,
        bytes_accessed=Mp * Kp * 2 + Kp * D * 2 + 3 * D * 4 + Mp * D * 2,
    )

    out = pl.pallas_call(
        _cube_embed_kernel,
        out_shape=jax.ShapeDtypeStruct((Mp, D), jnp.bfloat16),
        grid=(grid_m,),
        in_specs=[
            pl.BlockSpec((tm, Kp), lambda i: (i, 0)),
            pl.BlockSpec((Kp, D), lambda i: (0, 0)),
            pl.BlockSpec((3, D), lambda i: (0, 0)),
        ],
        out_specs=pl.BlockSpec((tm, D), lambda i: (i, 0)),
        compiler_params=pltpu.CompilerParams(
            dimension_semantics=("parallel",),
            vmem_limit_bytes=vmem_limit),
        cost_estimate=cost,
    )(p, w, bgb)

    # rearrange 'b d t h w -> b t (h w) d': rows already ordered (b, t, h, w)
    return out[:M].reshape(B, To, Ho * Wo, D)


def cube_embed_reference(x, params, cfg):
    # Pure-JAX reference on the SAME bf16-cast operands, f32 LN, f32 output.
    B = x.shape[0]
    D = params["w"].shape[0]
    p, w, (To, Ho, Wo) = _build_patches(x, params["w"], cfg)
    y = jnp.dot(p, w, preferred_element_type=jnp.float32) + params["b"][None, :]
    mu = jnp.mean(y, axis=-1, keepdims=True)
    var = jnp.mean(jnp.square(y - mu), axis=-1, keepdims=True)
    y = (y - mu) * jax.lax.rsqrt(var + 1e-5)
    y = y * params["g"][None, :] + params["beta"][None, :]
    return y.reshape(B, To, Ho * Wo, D)


def init_params(key, in_chans, embed_dim, segment_size, patch_size):
    k1, k2 = jax.random.split(key)
    std = 0.02
    return {
        # Conv3d(in_chans, embed_dim, kernel=(kt, ks, ks)) weight / bias
        "w": jax.random.normal(
            k1, (embed_dim, in_chans, segment_size, patch_size, patch_size),
            jnp.float32) * std,
        "b": jax.random.normal(k2, (embed_dim,), jnp.float32) * std,
        # LayerNorm(embed_dim) affine params
        "g": jnp.ones((embed_dim,), jnp.float32),
        "beta": jnp.zeros((embed_dim,), jnp.float32),
    }


# ----------------------------------- main --------------------------------------

if __name__ == "__main__":
    cfg = dict(
        seq_len=8, img_size=(16, 16),
        segment_size=2, patch_size=4,
        stride_t=2, stride_s=4,
        padding_t=0, padding_s=0,
        in_chans=4, embed_dim=128,
    )
    B = 2
    C, T = cfg["in_chans"], cfg["seq_len"]
    H, W = cfg["img_size"]
    D = cfg["embed_dim"]

    key = jax.random.PRNGKey(0)
    kx, kp = jax.random.split(key)
    x = jax.random.normal(kx, (B, C, T, H, W), jnp.float32)      # NCDHW like Conv3d
    params = init_params(kp, C, D, cfg["segment_size"], cfg["patch_size"])

    fwd = jax.jit(functools.partial(cube_embed_forward, cfg=cfg))
    out = jax.block_until_ready(fwd(x, params))

    To = (T + 2 * cfg["padding_t"] - cfg["segment_size"]) // cfg["stride_t"] + 1
    Ho = (H + 2 * cfg["padding_s"] - cfg["patch_size"]) // cfg["stride_s"] + 1
    Wo = (W + 2 * cfg["padding_s"] - cfg["patch_size"]) // cfg["stride_s"] + 1
    assert out.shape == (B, To, Ho * Wo, D), out.shape
    assert out.dtype == jnp.bfloat16
    out_f32 = out.astype(jnp.float32)
    assert bool(jnp.all(jnp.isfinite(out_f32)))

    # LayerNorm invariants (gamma=1, beta=0): per-token mean ~ 0, std ~ 1
    # (tolerances account for the bf16 output rounding)
    assert bool(jnp.all(jnp.abs(jnp.mean(out_f32, axis=-1)) < 1e-2))
    assert bool(jnp.all(jnp.abs(jnp.std(out_f32, axis=-1) - 1.0) < 5e-2))

    # cross-check against a pure-JAX f32-LN reference on the same bf16 operands
    ref = jax.block_until_ready(
        jax.jit(functools.partial(cube_embed_reference, cfg=cfg))(x, params))
    max_err = float(jnp.max(jnp.abs(out_f32 - ref)))
    assert max_err < 6e-2, max_err

    # TODO(synk): the conv GEMM uses bf16 operands/outputs (f32 accumulate & LN);
    # vs PyTorch's f32 Conv3d this introduces ~1e-3..1e-2-level differences.
    print("KERNEL_OK")
</pallas_src>

<mosaic_0001>
module attributes {stable_mosaic.version = 11 : i64} {
  func.func @_cube_embed_kernel(%arg0: i32, %arg1: memref<64x128xbf16, #tpu.memory_space<vmem>>, %arg2: memref<128x128xbf16, #tpu.memory_space<vmem>>, %arg3: memref<3x128xf32, #tpu.memory_space<vmem>>, %arg4: memref<64x128xbf16, #tpu.memory_space<vmem>>) attributes {dimension_semantics = [#tpu.dimension_semantics<parallel>], iteration_bounds = array<i64: 2>, scalar_prefetch = 0 : i64, scratch_operands = 0 : i64, tpu.core_type = #tpu.core_type<tc>, window_params = [{transform_indices = @transform_0, window_bounds = array<i64: 64, 128>}, {pipeline_mode = #tpu.pipeline_mode<synchronous>, transform_indices = @transform_1, window_bounds = array<i64: 128, 128>}, {pipeline_mode = #tpu.pipeline_mode<synchronous>, transform_indices = @transform_2, window_bounds = array<i64: 3, 128>}, {transform_indices = @transform_3, window_bounds = array<i64: 64, 128>}]} {
    %c0 = arith.constant 0 : index
    %c0_0 = arith.constant 0 : index
    %0 = vector.load %arg1[%c0, %c0_0] : memref<64x128xbf16, #tpu.memory_space<vmem>>, vector<64x128xbf16>
    %c0_1 = arith.constant 0 : index
    %c0_2 = arith.constant 0 : index
    %1 = vector.load %arg2[%c0_1, %c0_2] : memref<128x128xbf16, #tpu.memory_space<vmem>>, vector<128x128xbf16>
    %cst = arith.constant dense<0.000000e+00> : vector<64x128xf32>
    %2 = tpu.matmul %0, %1, %cst {dimension_numbers = #tpu.dot_dimension_numbers<[1], [0], [0], [1], [0, 0, 1, 1], [], []>} : vector<64x128xbf16>, vector<128x128xbf16>, vector<64x128xf32> -> vector<64x128xf32>
    %c0_3 = arith.constant 0 : index
    %c0_4 = arith.constant 0 : index
    %3 = vector.load %arg3[%c0_3, %c0_4] : memref<3x128xf32, #tpu.memory_space<vmem>>, vector<1x128xf32>
    %c1 = arith.constant 1 : index
    %c0_5 = arith.constant 0 : index
    %4 = vector.load %arg3[%c1, %c0_5] : memref<3x128xf32, #tpu.memory_space<vmem>>, vector<1x128xf32>
    %c2 = arith.constant 2 : index
    %c0_6 = arith.constant 0 : index
    %5 = vector.load %arg3[%c2, %c0_6] : memref<3x128xf32, #tpu.memory_space<vmem>>, vector<1x128xf32>
    %6 = vector.broadcast %3 : vector<1x128xf32> to vector<64x128xf32>
    %7 = arith.addf %2, %6 : vector<64x128xf32>
    %cst_7 = arith.constant dense<0.000000e+00> : vector<64xf32>
    %8 = vector.multi_reduction <add>, %7, %cst_7 [1] : vector<64x128xf32> to vector<64xf32>
    %9 = vector.shape_cast %8 : vector<64xf32> to vector<64x1xf32>
    %cst_8 = arith.constant 7.812500e-03 : f32
    %10 = vector.broadcast %cst_8 : f32 to vector<64x1xf32>
    %11 = arith.mulf %9, %10 : vector<64x1xf32>
    %12 = arith.mulf %7, %7 : vector<64x128xf32>
    %cst_9 = arith.constant dense<0.000000e+00> : vector<64xf32>
    %13 = vector.multi_reduction <add>, %12, %cst_9 [1] : vector<64x128xf32> to vector<64xf32>
    %14 = vector.shape_cast %13 : vector<64xf32> to vector<64x1xf32>
    %cst_10 = arith.constant 7.812500e-03 : f32
    %15 = vector.broadcast %cst_10 : f32 to vector<64x1xf32>
    %16 = arith.mulf %14, %15 : vector<64x1xf32>
    %17 = arith.mulf %11, %11 : vector<64x1xf32>
    %18 = arith.subf %16, %17 : vector<64x1xf32>
    %cst_11 = arith.constant 9.99999974E-6 : f32
    %19 = vector.broadcast %cst_11 : f32 to vector<64x1xf32>
    %20 = arith.addf %18, %19 : vector<64x1xf32>
    %21 = math.rsqrt %20 : vector<64x1xf32>
    %22 = vector.broadcast %4 : vector<1x128xf32> to vector<64x128xf32>
    %23 = vector.broadcast %21 : vector<64x1xf32> to vector<64x128xf32>
    %24 = arith.mulf %22, %23 : vector<64x128xf32>
    %25 = vector.broadcast %11 : vector<64x1xf32> to vector<64x128xf32>
    %26 = arith.mulf %25, %24 : vector<64x128xf32>
    %27 = vector.broadcast %5 : vector<1x128xf32> to vector<64x128xf32>
    %28 = arith.subf %27, %26 : vector<64x128xf32>
    %29 = arith.mulf %7, %24 : vector<64x128xf32>
    %30 = arith.addf %29, %28 : vector<64x128xf32>
    %31 = arith.truncf %30 : vector<64x128xf32> to vector<64x128xbf16>
    %c0_12 = arith.constant 0 : index
    %c0_13 = arith.constant 0 : index
    %32 = vector.load %arg4[%c0_12, %c0_13] : memref<64x128xbf16, #tpu.memory_space<vmem>>, vector<64x128xbf16>
    tpu.vector_store %arg4[%c0_12, %c0_13], %31 {strides = array<i32>} : memref<64x128xbf16, #tpu.memory_space<vmem>>, vector<64x128xbf16>,
    return
  }
  func.func @transform_0(%arg0: i32) -> (i32, i32) {
    %c0_i32 = arith.constant 0 : i32
    %c0_i32_0 = arith.constant 0 : i32
    return %arg0, %c0_i32 : i32, i32
  }
  func.func @transform_1(%arg0: i32) -> (i32, i32) {
    %c0_i32 = arith.constant 0 : i32
    %c0_i32_0 = arith.constant 0 : i32
    %c0_i32_1 = arith.constant 0 : i32
    return %c0_i32, %c0_i32_0 : i32, i32
  }
  func.func @transform_2(%arg0: i32) -> (i32, i32) {
    %c0_i32 = arith.constant 0 : i32
    %c0_i32_0 = arith.constant 0 : i32
    %c0_i32_1 = arith.constant 0 : i32
    return %c0_i32, %c0_i32_0 : i32, i32
  }
  func.func @transform_3(%arg0: i32) -> (i32, i32) {
    %c0_i32 = arith.constant 0 : i32
    %c0_i32_0 = arith.constant 0 : i32
    return %arg0, %c0_i32 : i32, i32
  }
}

</mosaic_0001>

<llo_original>
// kernel: cube_embed_forward.1
$region0: #{cube_embed_forward.1}
  #allocation0 [shape = 'u32[]', space=smem, size = 0x4, offset = 0x4, fixed_abs, tag = 'smem constant byte address 0x4 - core index']
  #allocation1 [shape = 'u32[72,128]{1,0:T(1,128)}', space=vmem, size = 0x9000, scoped, tag = 'internal scratch']
  %s0 = inlined_call_operand.vmem [shape: bf16[128,128], index: 0, kind: input, shape index: {}]
  %s1 = inlined_call_operand.vmem [shape: bf16[128,128], index: 1, kind: input, shape index: {}]
  %s2 = inlined_call_operand.vmem [shape: f32[3,128], index: 2, kind: input, shape index: {}]
  %s3 = inlined_call_operand.hbm [shape: bf16[128,128], index: 3, kind: output, shape index: {}]
  %s4 = sld [smem:[#allocation0]]
  $region45: #{cube_embed_forward.1} parent=0
    _
  %s6 = ssub.s32 1, %s4
  %s7 = scalar_select 0, %s6, %s4
  $region1: #{cube_embed_forward.1} parent=0
    #allocation2 [shape = 'u8[32768]{0}', space=vmem, size = 0x8000, scoped, tag = 'output window, operand 0']
    #allocation3 [shape = 's32[2]{0}', space=sflag, size = 0x8, scoped, tag = 'scoped memory for cube_embed_forward.1']
    %8 = vsyncpa [#allocation3], 0
    %s9 = scalar_lea.sflag [#allocation3], 1
    %10 = vsyncpa %s9, 0
    loop: start=0, step=1, limit=4
    $region2: #{cube_embed_forward.1} parent=1 // loop_pre_header
      _
    $region3: #{cube_embed_forward.1} parent=1 // loop_header
      %s12 = sphi 0, %s16
      %p13 = scmp.ge.s32.totalorder %s12, 4
      %s22 = sphi 0, %s24
      %s25 = sphi 0, %s22
      %s26 = sphi 0, %s25
      %s42 = sphi 0, %s26
      %s46 = sphi 0, %s46
      %s48 = sphi 0, %s46
      %s49 = sphi 0, %s48
      %s63 = sphi 0, %s49
      %s67 = sphi 0, %s67
      %s69 = sphi 0, %s67
      %s70 = sphi 0, %s69
      %s84 = sphi 0, %s70
      %s90 = sphi 0, %s92
      %s93 = sphi 0, %s90
      %s94 = sphi 0, %s93
      %s110 = sphi 0, %s94
    $region4: #{cube_embed_forward.1} parent=1 // loop_header_branch
      %15 = sbr.rel (%p13) target = $region8
    $region5: #{cube_embed_forward.1} parent=1 // loop_body
      %s17 = ssub.s32 %s12, 1
      %s18 = ssub.s32 %s12, 2
      %s19 = sadd.s32 %s12, 1
      %s20 = ssub.s32 %s12, %s19
      %p21 = scmp.eq.s32.totalorder %s20, 0
      %s23 = sadd.s32 %s22, 1
      %s24 = scalar_select %p21, %s22, %s23
      %p27 = pneg %p21
      %p28 = scmp.eq.s32.totalorder %s12, 1
      %p29 = por %p27, %p28
      %p30 = scmp.ne.s32.totalorder %s22, %s25
      %p31 = scmp.eq.s32.totalorder %s12, 0
      %p32 = por %p30, %p31
      %p33 = scmp.ne.s32.totalorder %s22, %s25
      %p34 = scmp.eq.s32.totalorder %s17, 1
      %p35 = por %p33, %p34
      %p36 = scmp.ne.s32.totalorder %s25, %s26
      %p37 = scmp.eq.s32.totalorder %s17, 0
      %p38 = por %p36, %p37
      %p39 = scmp.ne.s32.totalorder %s25, %s26
      %p40 = scmp.eq.s32.totalorder %s18, 1
      %p41 = por %p39, %p40
      %p43 = scmp.ne.s32.totalorder %s26, %s42
      %p44 = scmp.eq.s32.totalorder %s18, 0
      %p45 = por %p43, %p44
      %s47 = sadd.s32 %s46, 1
      %p50 = scmp.eq.s32.totalorder %s12, 1
      %p51 = scmp.ne.s32.totalorder %s46, %s48
      %p52 = scmp.eq.s32.totalorder %s12, 0
      %p53 = por %p51, %p52
      %p54 = scmp.ne.s32.totalorder %s46, %s48
      %p55 = scmp.eq.s32.totalorder %s17, 1
      %p56 = por %p54, %p55
      %p57 = scmp.ne.s32.totalorder %s48, %s49
      %p58 = scmp.eq.s32.totalorder %s17, 0
      %p59 = por %p57, %p58
      %p60 = scmp.ne.s32.totalorder %s48, %s49
      %p61 = scmp.eq.s32.totalorder %s18, 1
      %p62 = por %p60, %p61
      %p64 = scmp.ne.s32.totalorder %s49, %s63
      %p65 = scmp.eq.s32.totalorder %s18, 0
      %p66 = por %p64, %p65
      %s68 = sadd.s32 %s67, 1
      %p71 = scmp.eq.s32.totalorder %s12, 1
      %p72 = scmp.ne.s32.totalorder %s67, %s69
      %p73 = scmp.eq.s32.totalorder %s12, 0
      %p74 = por %p72, %p73
      %p75 = scmp.ne.s32.totalorder %s67, %s69
      %p76 = scmp.eq.s32.totalorder %s17, 1
      %p77 = por %p75, %p76
      %p78 = scmp.ne.s32.totalorder %s69, %s70
      %p79 = scmp.eq.s32.totalorder %s17, 0
      %p80 = por %p78, %p79
      %p81 = scmp.ne.s32.totalorder %s69, %s70
      %p82 = scmp.eq.s32.totalorder %s18, 1
      %p83 = por %p81, %p82
      %p85 = scmp.ne.s32.totalorder %s70, %s84
      %p86 = scmp.eq.s32.totalorder %s18, 0
      %p87 = por %p85, %p86
      %s88 = ssub.s32 %s12, %s19
      %p89 = scmp.eq.s32.totalorder %s88, 0
      %s91 = sadd.s32 %s90, 1
      %s92 = scalar_select %p89, %s90, %s91
      %p95 = pneg %p89
      %p96 = scmp.eq.s32.totalorder %s12, 1
      %p97 = por %p95, %p96
      %p98 = scmp.ne.s32.totalorder %s90, %s93
      %p99 = scmp.eq.s32.totalorder %s12, 0
      %p100 = por %p98, %p99
      %p101 = scmp.ne.s32.totalorder %s90, %s93
      %p102 = scmp.eq.s32.totalorder %s17, 1
      %p103 = por %p101, %p102
      %p104 = scmp.ne.s32.totalorder %s93, %s94
      %p105 = scmp.eq.s32.totalorder %s17, 0
      %p106 = por %p104, %p105
      %p107 = scmp.ne.s32.totalorder %s93, %s94
      %p108 = scmp.eq.s32.totalorder %s18, 1
      %p109 = por %p107, %p108
      %p111 = scmp.ne.s32.totalorder %s94, %s110
      %p112 = scmp.eq.s32.totalorder %s18, 0
      %p113 = por %p111, %p112
      %p114 = scmp.le.s32.totalorder 1, %s12
      %p115 = scmp.lt.s32.totalorder %s12, 3
      %p116 = pnand %p114, %p115
      %p117 = pneg %p116
      // Predicated region
      $region9: #{cube_embed_forward.1} parent=5 // pred_check
        _
      $region10: #{cube_embed_forward.1} parent=5 // pred_check_branch
        %119 = sbr.rel (%p116) target = $region12
      $region11: #{cube_embed_forward.1} parent=5 // pred_region
        %s120 = ssub.s32 %s12, 1
        // Predicated region
        $region13: #{cube_embed_forward.1} parent=11 // pred_check
          %p121 = pneg %p59
        $region14: #{cube_embed_forward.1} parent=11 // pred_check_branch
          %123 = sbr.rel (%p121) target = $region16
        $region15: #{cube_embed_forward.1} parent=11 // pred_region
          _
        $region16: #{cube_embed_forward.1} parent=11 // pred_fallthru
          _
        // Predicated region
        $region17: #{cube_embed_forward.1} parent=11 // pred_check
          %p124 = pneg %p80
        $region18: #{cube_embed_forward.1} parent=11 // pred_check_branch
          %126 = sbr.rel (%p124) target = $region20
        $region19: #{cube_embed_forward.1} parent=11 // pred_region
          _
        $region20: #{cube_embed_forward.1} parent=11 // pred_fallthru
          _
      $region12: #{cube_embed_forward.1} parent=5 // pred_fallthru
        _
      %p127 = scmp.lt.s32.totalorder %s12, 2
      // Predicated region
      $region21: #{cube_embed_forward.1} parent=5 // pred_check
        %p128 = pneg %p127
      $region22: #{cube_embed_forward.1} parent=5 // pred_check_branch
        %130 = sbr.rel (%p128) target = $region24
      $region23: #{cube_embed_forward.1} parent=5 // pred_region
        // Predicated region
        $region25: #{cube_embed_forward.1} parent=23 // pred_check
          %p131 = pneg %p32
        $region26: #{cube_embed_forward.1} parent=23 // pred_check_branch
          %133 = sbr.rel (%p131) target = $region28
        $region27: #{cube_embed_forward.1} parent=23 // pred_region
          %s134 = smul.u32 8, %s12
          %p135 = scmp.lt.s32.totalorder %s134, 15
          %s136 = scalar_select %p135, %s134, 15
          %s137 = smul.addr %s136, 4
          %s138 = scalar_lea.vmem %s0, %s137
          %s139 = smul.u32 8, %s12
        $region28: #{cube_embed_forward.1} parent=23 // pred_fallthru
          _
      $region24: #{cube_embed_forward.1} parent=5 // pred_fallthru
        _
      %p140 = scmp.le.s32.totalorder 1, %s12
      %p141 = scmp.lt.s32.totalorder %s12, 3
      %p142 = pnand %p140, %p141
      %p143 = pneg %p142
      // Predicated region
      $region29: #{cube_embed_forward.1} parent=5 // pred_check
        _
      $region30: #{cube_embed_forward.1} parent=5 // pred_check_branch
        %145 = sbr.rel (%p142) target = $region32
      $region31: #{cube_embed_forward.1} parent=5 // pred_region
        %s146 = ssub.s32 %s12, 1
        %s147 = smul.u32 8, %s17
        %p148 = scmp.lt.s32.totalorder %s147, 15
        %s149 = scalar_select %p148, %s147, 15
        %s150 = smul.addr %s149, 4
        %s151 = scalar_lea.vmem %s0, %s150
        %p152 = pneg %p38
        %p153 = pneg %p35
        %p154 = pneg %p59
        %p155 = pneg %p56
        %p156 = pneg %p80
        %p157 = pneg %p77
        %p158 = pneg %p106
        %p159 = pneg %p103
        %s160 = sand.u32 %s93, 1
        %s161 = scalar_lea.sflag [#allocation3], %s160
        %s162 = sand.u32 %s93, 1
        %s163 = smul.addr %s162, 32
        %s164 = scalar_lea.vmem [#allocation2], %s163
        %s165 = smul.u32 8, %s17
        %p166 = scmp.lt.s32.totalorder %s165, 15
        %s167 = scalar_select %p166, %s165, 15
        %s168 = smul.addr %s167, 4
        %s169 = scalar_lea.vmem %s0, %s168
        %s170 = smul.u32 8, %s17
        %s171 = smul.u32 8, %s17
        %v172 = vld [vmem:[%s169] sm:$0xf]
        %v173 = vld [vmem:[%s169 + $0x4] sm:$0xf]
        %v174 = vld [vmem:[%s169 + $0x8] sm:$0xf]
        %v175 = vld [vmem:[%s169 + $0xc] sm:$0xf]
        %v176 = vld [vmem:[%s169 + $0x10] sm:$0xf]
        %v177 = vld [vmem:[%s169 + $0x14] sm:$0xf]
        %v178 = vld [vmem:[%s169 + $0x18] sm:$0xf]
        %v179 = vld [vmem:[%s169 + $0x1c] sm:$0xf]
        %v180 = vld [vmem:[%s1] sm:$0xf]
        %v181 = vld [vmem:[%s1 + $0x4] sm:$0xf]
        %v182 = vld [vmem:[%s1 + $0x8] sm:$0xf]
        %v183 = vld [vmem:[%s1 + $0xc] sm:$0xf]
        %v184 = vld [vmem:[%s1 + $0x10] sm:$0xf]
        %v185 = vld [vmem:[%s1 + $0x14] sm:$0xf]
        %v186 = vld [vmem:[%s1 + $0x18] sm:$0xf]
        %v187 = vld [vmem:[%s1 + $0x1c] sm:$0xf]
        %v188 = vld [vmem:[%s1 + $0x20] sm:$0xf]
        %v189 = vld [vmem:[%s1 + $0x24] sm:$0xf]
        %v190 = vld [vmem:[%s1 + $0x28] sm:$0xf]
        %v191 = vld [vmem:[%s1 + $0x2c] sm:$0xf]
        %v192 = vld [vmem:[%s1 + $0x30] sm:$0xf]
        %v193 = vld [vmem:[%s1 + $0x34] sm:$0xf]
        %v194 = vld [vmem:[%s1 + $0x38] sm:$0xf]
        %v195 = vld [vmem:[%s1 + $0x3c] sm:$0xf]
        %v196 = vld [vmem:[%s2] sm:$0x1]
        %v197 = vld [vmem:[%s2 + $0x1] sm:$0x1]
        %v198 = vld [vmem:[%s2 + $0x2] sm:$0x1]
        %v199 = vperm.slane %v196, 0
        %v208 = vunpack.c.l.b16 %v172
        %v209 = vunpack.c.l.b16 %v173
        %v210 = vunpack.c.l.b16 %v174
        %v211 = vunpack.c.l.b16 %v175
        %v212 = vunpack.c.l.b16 %v176
        %v213 = vunpack.c.l.b16 %v177
        %v214 = vunpack.c.l.b16 %v178
        %v215 = vunpack.c.l.b16 %v179
        %v216 = vpack.c.b16 %v209, %v208
        %v217 = vpack.c.b16 %v211, %v210
        %v218 = vpack.c.b16 %v213, %v212
        %v219 = vpack.c.b16 %v215, %v214
        %v240 = vunpack.c.l.b16 %v180
        %v241 = vunpack.c.l.b16 %v181
        %v242 = vunpack.c.l.b16 %v182
        %v243 = vunpack.c.l.b16 %v183
        %v244 = vunpack.c.l.b16 %v184
        %v245 = vunpack.c.l.b16 %v185
        %v246 = vunpack.c.l.b16 %v186
        %v247 = vunpack.c.l.b16 %v187
        %v248 = vunpack.c.l.b16 %v188
        %v249 = vunpack.c.l.b16 %v189
        %v250 = vunpack.c.l.b16 %v190
        %v251 = vunpack.c.l.b16 %v191
        %v252 = vunpack.c.l.b16 %v192
        %v253 = vunpack.c.l.b16 %v193
        %v254 = vunpack.c.l.b16 %v194
        %v255 = vunpack.c.l.b16 %v195
        %v256 = vpack.c.b16 %v241, %v240
        %v257 = vpack.c.b16 %v243, %v242
        %v258 = vpack.c.b16 %v245, %v244
        %v259 = vpack.c.b16 %v247, %v246
        %v260 = vpack.c.b16 %v249, %v248
        %v261 = vpack.c.b16 %v251, %v250
        %v262 = vpack.c.b16 %v253, %v252
        %v263 = vpack.c.b16 %v255, %v254
        %272 = vmatpush.bf16.msra.mxu0 %v263
        %273 = vmatpush.bf16.msra.mxu0 %v262
        %274 = vmatpush.bf16.msra.mxu0 %v261
        %275 = vmatpush.bf16.msra.mxu0 %v260
        %276 = vmatpush.bf16.msra.mxu0 %v259
        %277 = vmatpush.bf16.msra.mxu0 %v258
        %278 = vmatpush.bf16.msra.mxu0 %v257
        %279 = vmatpush.bf16.msra.mxu0 %v256
        %280 = vmatmul.bf16.gmra.mxu0 %v216
        %v281 = vpop.f32.mrf.mxu0
        %v282 = vadd.f32 %v199, %v281
        %v283 = vpop.f32.mrf.mxu0
        %v284 = vadd.f32 %v199, %v283
        %285 = vmatmul.bf16.gmra.mxu0 %v217
        %v286 = vpop.f32.mrf.mxu0
        %v287 = vadd.f32 %v199, %v286
        %v288 = vpop.f32.mrf.mxu0
        %v289 = vadd.f32 %v199, %v288
        %290 = vmatmul.bf16.gmra.mxu0 %v218
        %v291 = vpop.f32.mrf.mxu0
        %v292 = vadd.f32 %v199, %v291
        %v293 = vpop.f32.mrf.mxu0
        %v294 = vadd.f32 %v199, %v293
        %295 = vmatmul.bf16.gmra.mxu0 %v219
        %v296 = vpop.f32.mrf.mxu0
        %v297 = vadd.f32 %v199, %v296
        %v298 = vpop.f32.mrf.mxu0
        %v299 = vadd.f32 %v199, %v298
        %300 = vdwg.mxu0
        %301 = vadd.xlane.f32.xlu0 %v282
        %v302 = vpop.xlane.xlu0 %301
        %303 = vadd.xlane.f32.xlu0 %v284
        %v304 = vpop.xlane.xlu0 %303
        %305 = vadd.xlane.f32.xlu0 %v287
        %v306 = vpop.xlane.xlu0 %305
        %307 = vadd.xlane.f32.xlu0 %v289
        %v308 = vpop.xlane.xlu0 %307
        %309 = vadd.xlane.f32.xlu0 %v292
        %v310 = vpop.xlane.xlu0 %309
        %311 = vadd.xlane.f32.xlu0 %v294
        %v312 = vpop.xlane.xlu0 %311
        %313 = vadd.xlane.f32.xlu0 %v297
        %v314 = vpop.xlane.xlu0 %313
        %315 = vadd.xlane.f32.xlu0 %v299
        %v316 = vpop.xlane.xlu0 %315
        %v317 = vmul.f32 %v302, 0.0078125
        %v318 = vmul.f32 %v304, 0.0078125
        %v319 = vmul.f32 %v306, 0.0078125
        %v320 = vmul.f32 %v308, 0.0078125
        %v321 = vmul.f32 %v310, 0.0078125
        %v322 = vmul.f32 %v312, 0.0078125
        %v323 = vmul.f32 %v314, 0.0078125
        %v324 = vmul.f32 %v316, 0.0078125
        %v325 = vmul.f32 %v282, %v282
        %v326 = vmul.f32 %v284, %v284
        %v327 = vmul.f32 %v287, %v287
        %v328 = vmul.f32 %v289, %v289
        %v329 = vmul.f32 %v292, %v292
        %v330 = vmul.f32 %v294, %v294
        %v331 = vmul.f32 %v297, %v297
        %v332 = vmul.f32 %v299, %v299
        %333 = vadd.xlane.f32.xlu0 %v325
        %v334 = vpop.xlane.xlu0 %333
        %335 = vadd.xlane.f32.xlu0 %v326
        %v336 = vpop.xlane.xlu0 %335
        %337 = vadd.xlane.f32.xlu0 %v327
        %v338 = vpop.xlane.xlu0 %337
        %339 = vadd.xlane.f32.xlu0 %v328
        %v340 = vpop.xlane.xlu0 %339
        %341 = vadd.xlane.f32.xlu0 %v329
        %v342 = vpop.xlane.xlu0 %341
        %343 = vadd.xlane.f32.xlu0 %v330
        %v344 = vpop.xlane.xlu0 %343
        %345 = vadd.xlane.f32.xlu0 %v331
        %v346 = vpop.xlane.xlu0 %345
        %347 = vadd.xlane.f32.xlu0 %v332
        %v348 = vpop.xlane.xlu0 %347
        %v349 = vmul.f32 %v334, 0.0078125
        %v350 = vmul.f32 %v336, 0.0078125
        %v351 = vmul.f32 %v338, 0.0078125
        %v352 = vmul.f32 %v340, 0.0078125
        %v353 = vmul.f32 %v342, 0.0078125
        %v354 = vmul.f32 %v344, 0.0078125
        %v355 = vmul.f32 %v346, 0.0078125
        %v356 = vmul.f32 %v348, 0.0078125
        %v357 = vmul.f32 %v317, %v317
        %v358 = vmul.f32 %v318, %v318
        %v359 = vmul.f32 %v319, %v319
        %v360 = vmul.f32 %v320, %v320
        %v361 = vmul.f32 %v321, %v321
        %v362 = vmul.f32 %v322, %v322
        %v363 = vmul.f32 %v323, %v323
        %v364 = vmul.f32 %v324, %v324
        %v365 = vsub.f32 %v349, %v357
        %v366 = vsub.f32 %v350, %v358
        %v367 = vsub.f32 %v351, %v359
        %v368 = vsub.f32 %v352, %v360
        %v369 = vsub.f32 %v353, %v361
        %v370 = vsub.f32 %v354, %v362
        %v371 = vsub.f32 %v355, %v363
        %v372 = vsub.f32 %v356, %v364
        %v373 = vadd.f32 %v365, 1e-05
        %v374 = vadd.f32 %v366, 1e-05
        %v375 = vadd.f32 %v367, 1e-05
        %v376 = vadd.f32 %v368, 1e-05
        %v377 = vadd.f32 %v369, 1e-05
        %v378 = vadd.f32 %v370, 1e-05
        %v379 = vadd.f32 %v371, 1e-05
        %v380 = vadd.f32 %v372, 1e-05
        %v381 = vrsqrt.pop %v373
        %v382 = vmul.f32 %v381, %v373
        %v383 = vmul.f32 %v382, %v381
        %v384 = vmul.f32 0.5, %v383
        %v385 = vsub.f32 1.5, %v384
        %v386 = vmul.f32 %v381, %v385
        %vm387 = vweird.f32 %v373
        %vm388 = vweird.f32 %v381
        %vm389 = vmor %vm387, %vm388
        %v390 = vsel %vm389, %v381, %v386
        %v391 = vrsqrt.pop %v374
        %v392 = vmul.f32 %v391, %v374
        %v393 = vmul.f32 %v392, %v391
        %v394 = vmul.f32 0.5, %v393
        %v395 = vsub.f32 1.5, %v394
        %v396 = vmul.f32 %v391, %v395
        %vm397 = vweird.f32 %v374
        %vm398 = vweird.f32 %v391
        %vm399 = vmor %vm397, %vm398
        %v400 = vsel %vm399, %v391, %v396
        %v401 = vrsqrt.pop %v375
        %v402 = vmul.f32 %v401, %v375
        %v403 = vmul.f32 %v402, %v401
        %v404 = vmul.f32 0.5, %v403
        %v405 = vsub.f32 1.5, %v404
        %v406 = vmul.f32 %v401, %v405
        %vm407 = vweird.f32 %v375
        %vm408 = vweird.f32 %v401
        %vm409 = vmor %vm407, %vm408
        %v410 = vsel %vm409, %v401, %v406
        %v411 = vrsqrt.pop %v376
        %v412 = vmul.f32 %v411, %v376
        %v413 = vmul.f32 %v412, %v411
        %v414 = vmul.f32 0.5, %v413
        %v415 = vsub.f32 1.5, %v414
        %v416 = vmul.f32 %v411, %v415
        %vm417 = vweird.f32 %v376
        %vm418 = vweird.f32 %v411
        %vm419 = vmor %vm417, %vm418
        %v420 = vsel %vm419, %v411, %v416
        %v421 = vrsqrt.pop %v377
        %v422 = vmul.f32 %v421, %v377
        %v423 = vmul.f32 %v422, %v421
        %v424 = vmul.f32 0.5, %v423
        %v425 = vsub.f32 1.5, %v424
        %v426 = vmul.f32 %v421, %v425
        %vm427 = vweird.f32 %v377
        %vm428 = vweird.f32 %v421
        %vm429 = vmor %vm427, %vm428
        %v430 = vsel %vm429, %v421, %v426
        %v431 = vrsqrt.pop %v378
        %v432 = vmul.f32 %v431, %v378
        %v433 = vmul.f32 %v432, %v431
        %v434 = vmul.f32 0.5, %v433
        %v435 = vsub.f32 1.5, %v434
        %v436 = vmul.f32 %v431, %v435
        %vm437 = vweird.f32 %v378
        %vm438 = vweird.f32 %v431
        %vm439 = vmor %vm437, %vm438
        %v440 = vsel %vm439, %v431, %v436
        %v441 = vrsqrt.pop %v379
        %v442 = vmul.f32 %v441, %v379
        %v443 = vmul.f32 %v442, %v441
        %v444 = vmul.f32 0.5, %v443
        %v445 = vsub.f32 1.5, %v444
        %v446 = vmul.f32 %v441, %v445
        %vm447 = vweird.f32 %v379
        %vm448 = vweird.f32 %v441
        %vm449 = vmor %vm447, %vm448
        %v450 = vsel %vm449, %v441, %v446
        %v451 = vrsqrt.pop %v380
        %v452 = vmul.f32 %v451, %v380
        %v453 = vmul.f32 %v452, %v451
        %v454 = vmul.f32 0.5, %v453
        %v455 = vsub.f32 1.5, %v454
        %v456 = vmul.f32 %v451, %v455
        %vm457 = vweird.f32 %v380
        %vm458 = vweird.f32 %v451
        %vm459 = vmor %vm457, %vm458
        %v460 = vsel %vm459, %v451, %v456
        %v461 = vperm.slane %v197, 0
        %v462 = vmul.f32 %v461, %v390
        %v463 = vmul.f32 %v461, %v400
        %v464 = vmul.f32 %v461, %v410
        %v465 = vmul.f32 %v461, %v420
        %v466 = vmul.f32 %v461, %v430
        %v467 = vmul.f32 %v461, %v440
        %v468 = vmul.f32 %v461, %v450
        %v469 = vmul.f32 %v461, %v460
        %v470 = vmul.f32 %v317, %v462
        %v471 = vmul.f32 %v318, %v463
        %v472 = vmul.f32 %v319, %v464
        %v473 = vmul.f32 %v320, %v465
        %v474 = vmul.f32 %v321, %v466
        %v475 = vmul.f32 %v322, %v467
        %v476 = vmul.f32 %v323, %v468
        %v477 = vmul.f32 %v324, %v469
        %v478 = vperm.slane %v198, 0
        %v479 = vsub.f32 %v478, %v470
        %v480 = vsub.f32 %v478, %v471
        %v481 = vsub.f32 %v478, %v472
        %v482 = vsub.f32 %v478, %v473
        %v483 = vsub.f32 %v478, %v474
        %v484 = vsub.f32 %v478, %v475
        %v485 = vsub.f32 %v478, %v476
        %v486 = vsub.f32 %v478, %v477
        %v487 = vmul.f32 %v282, %v462
        %v488 = vmul.f32 %v284, %v463
        %v489 = vmul.f32 %v287, %v464
        %v490 = vmul.f32 %v289, %v465
        %v491 = vmul.f32 %v292, %v466
        %v492 = vmul.f32 %v294, %v467
        %v493 = vmul.f32 %v297, %v468
        %v494 = vmul.f32 %v299, %v469
        %v495 = vadd.f32 %v487, %v479
        %v496 = vadd.f32 %v488, %v480
        %v497 = vadd.f32 %v489, %v481
        %v498 = vadd.f32 %v490, %v482
        %v499 = vadd.f32 %v491, %v483
        %v500 = vadd.f32 %v492, %v484
        %v501 = vadd.f32 %v493, %v485
        %v502 = vadd.f32 %v494, %v486
        %v503 = vpack.c.bf16 %v495, %v495
        %v504 = vpack.c.bf16 %v496, %v496
        %v505 = vpack.c.bf16 %v497, %v497
        %v506 = vpack.c.bf16 %v498, %v498
        %v507 = vpack.c.bf16 %v499, %v499
        %v508 = vpack.c.bf16 %v500, %v500
        %v509 = vpack.c.bf16 %v501, %v501
        %v510 = vpack.c.bf16 %v502, %v502
        %511 = vst [vmem:[%s164] sm:$0xf] %v503
        %512 = vst [vmem:[%s164 + $0x4] sm:$0xf] %v504
        %513 = vst [vmem:[%s164 + $0x8] sm:$0xf] %v505
        %514 = vst [vmem:[%s164 + $0xc] sm:$0xf] %v506
        %515 = vst [vmem:[%s164 + $0x10] sm:$0xf] %v507
        %516 = vst [vmem:[%s164 + $0x14] sm:$0xf] %v508
        %517 = vst [vmem:[%s164 + $0x18] sm:$0xf] %v509
        %518 = vst [vmem:[%s164 + $0x1c] sm:$0xf] %v510
        %s519 = sand.u32 %s93, 1
        %s520 = scalar_lea.sflag [#allocation3], %s519
        %s521 = sand.u32 %s93, 1
        %s522 = smul.addr %s521, 32
        %s523 = scalar_lea.vmem [#allocation2], %s522
        // Predicated region
        $region33: #{cube_embed_forward.1} parent=31 // pred_check
          %p524 = pneg %p103
        $region34: #{cube_embed_forward.1} parent=31 // pred_check_branch
          %526 = sbr.rel (%p524) target = $region36
        $region35: #{cube_embed_forward.1} parent=31 // pred_region
          %s527 = smul.u32 8, %s17
          %529 = vsyncadd %s520, 0
          %s530 = smul.addr %s527, 4
          %s531 = scalar_lea.hbm %s3, %s530
          %s532 = sshll.u32 %s523, 4
          %s533 = int_to_ptr.vmem [resolvable:$true] %s532
          %s534 = sshll.u32 %s531, 4
          %s535 = int_to_ptr.hbm [resolvable:$true] %s534
          %540 = dma.vmem_to_hbm [thread:$0]  %s533, 512, %s535, %s520, 64, 64, 4
        $region36: #{cube_embed_forward.1} parent=31 // pred_fallthru
          _
      $region32: #{cube_embed_forward.1} parent=5 // pred_fallthru
        _
      %p541 = scmp.le.s32.totalorder 2, %s12
      // Predicated region
      $region37: #{cube_embed_forward.1} parent=5 // pred_check
        %p542 = pneg %p541
      $region38: #{cube_embed_forward.1} parent=5 // pred_check_branch
        %544 = sbr.rel (%p542) target = $region40
      $region39: #{cube_embed_forward.1} parent=5 // pred_region
        %s545 = ssub.s32 %s12, 2
        // Predicated region
        $region41: #{cube_embed_forward.1} parent=39 // pred_check
          %p546 = pneg %p109
        $region42: #{cube_embed_forward.1} parent=39 // pred_check_branch
          %548 = sbr.rel (%p546) target = $region44
        $region43: #{cube_embed_forward.1} parent=39 // pred_region
          %s549 = sand.u32 %s94, 1
          %s550 = scalar_lea.sflag [#allocation3], %s549
          %s551 = sand.u32 %s94, 1
          %s552 = smul.addr %s551, 32
          %s553 = scalar_lea.vmem [#allocation2], %s552
          %555 = dma.done %s550, 512
        $region44: #{cube_embed_forward.1} parent=39 // pred_fallthru
          _
      $region40: #{cube_embed_forward.1} parent=5 // pred_fallthru
        _
    $region6: #{cube_embed_forward.1} parent=1 // loop_footer
      %s16 = sadd.s32 1, %s12
    $region7: #{cube_embed_forward.1} parent=1 // loop_footer_branch
      %11 = sbr.rel target = $region3
    $region8: #{cube_embed_forward.1} parent=1 // loop_exit
      _
    %556 = vsyncpa [#allocation3], 1
    %s557 = scalar_lea.sflag [#allocation3], 1
    %558 = vsyncpa %s557, 1

</llo_original>
